<compile_context>
chip_gen: v6e
topology: v6e:2x2x1
jax: 0.10.0
libtpu: 0.0.40
codegen_flags: <defaults>
</compile_context>

<pallas_src>
import functools

import jax
import jax.numpy as jnp
from jax.experimental import pallas as pl
from jax.experimental.pallas import tpu as pltpu


def _round_up(x, m):
    return ((x + m - 1) // m) * m


def _sage_kernel(off_ref, cnt_ref, dst_ref, xmsg_ref, wmsg_ref, bmsg_ref,
                 h_ref, wa1_ref, wa2_ref, bap_ref, o_ref, sum_acc,
                 *, ndim_out, approx_recip):
    i = pl.program_id(0)                 # node-tile index ("parallel")
    k = pl.program_id(1)                 # edge-block step for this tile ("arbitrary")
    tn = sum_acc.shape[0]
    te = dst_ref.shape[1]
    cdtype = xmsg_ref.dtype              # MXU operand dtype (bf16 by default)

    @pl.when(k == 0)
    def _init():
        sum_acc[...] = jnp.zeros_like(sum_acc)

    # Only edge blocks that belong to this node tile's dst range do work; steps
    # past the tile's own count re-use the previous block (index_map clamps, so
    # the DMA is skipped) and all compute is skipped here.
    @pl.when(k < cnt_ref[i])
    def _accumulate():
        # hit[n, e] = (dst[e] == i*tn + n).  The scalar i*tn offset is folded
        # into the (1, te) dst row, keeping the (tn, te) pass to iota + compare.
        rel = dst_ref[...] - i * tn                                   # (1, te)
        hit = jax.lax.broadcasted_iota(jnp.int32, (tn, te), 0) == rel
        onehot = hit.astype(cdtype)                                   # exact 0/1

        # Edge messages; lane `ndim_out` carries the constant-1 degree column
        # (W_msg bias is deferred to finalize so the mean stays exact).
        m = jnp.dot(xmsg_ref[...], wmsg_ref[...], preferred_element_type=cdtype)

        # f32 accumulation of both the per-node message sums and, in lane
        # ndim_out, the in-degree counts (exact up to 2^24 edges per node).
        sum_acc[...] += jnp.dot(onehot, m, preferred_element_type=jnp.float32)

    @pl.when(k == pl.num_programs(1) - 1)
    def _finalize():
        s = sum_acc[...]                                              # (tn, dpad)
        deg = s[:, ndim_out:ndim_out + 1]                             # (tn, 1)
        has = (deg > 0).astype(jnp.float32)
        inv = pl.reciprocal(jnp.maximum(deg, 1.0), approx=approx_recip)
        # Mean over incoming edges; exactly zero (not bias) for isolated nodes.
        h_neigh = s * (inv * has) + bmsg_ref[...] * has
        z = (jnp.dot(h_ref[...], wa1_ref[...], preferred_element_type=jnp.float32)
             + jnp.dot(h_neigh.astype(cdtype), wa2_ref[...],
                       preferred_element_type=jnp.float32)
             + bap_ref[...])
        o_ref[...] = jnp.maximum(z, 0.0).astype(o_ref.dtype)


def sage_layer_pallas(nfeats, efeats, src, dst, params, *,
                      compute_dtype=jnp.bfloat16, out_dtype=jnp.float32,
                      tn=512, te=2048, vmem_limit_bytes=48 * 1024 * 1024):
    """nfeats: [N, 1, ndim_in], efeats: [E, 1, edims], src/dst: [E] int."""
    W_msg, b_msg, W_apply, b_apply = params
    N = nfeats.shape[0]
    E = efeats.shape[0]
    ndim_in = nfeats.shape[-1]
    edims = efeats.shape[-1]
    ndim_out = W_msg.shape[0]
    kmsg = ndim_in + edims
    # +1 guarantees a spare padded output lane for the in-matmul degree column.
    dpad = _round_up(ndim_out + 1, 128)

    # --- tile sizes (clamped for small problems) ------------------------------
    n8 = _round_up(N, 8)
    tn = min(tn, n8)
    if n8 > 8 and n8 <= tn:
        # >= 2 node tiles so both v7x TensorCores get work on the parallel axis.
        tn = _round_up((n8 + 1) // 2, 8)
    te = min(te, _round_up(E, 128))
    n_pad = _round_up(N, tn)
    e_pad = _round_up(E, te)
    n_tiles = n_pad // tn
    nkb = e_pad // te

    h32 = nfeats.reshape(N, ndim_in).astype(jnp.float32)
    e32 = efeats.reshape(E, edims).astype(jnp.float32)
    src = src.astype(jnp.int32)
    dst = dst.astype(jnp.int32)

    # --- sort edges by destination so each node tile touches only its blocks --
    order = jnp.argsort(dst)
    dst_s = dst[order]

    # Fused gather + concat + ones(degree) column + cast: the [E, kmsg+1] edge
    # slab is materialized once, directly in the compute dtype.
    # TODO(synk): move the h[src] gather fully in-kernel (scalar-prefetched src
    # + DMA row gather) so the [E, kmsg+1] intermediate never hits HBM.
    xmsg = jnp.concatenate(
        [h32[src[order]], e32[order], jnp.ones((E, 1), jnp.float32)],
        axis=1).astype(compute_dtype)

    # Per-node-tile edge-block ranges (block granular: a block straddling two
    # adjacent tiles is visited by both; foreign rows never match the onehot).
    bounds = jnp.arange(n_tiles + 1, dtype=jnp.int32) * tn
    seg = jnp.searchsorted(dst_s, bounds, side="left").astype(jnp.int32)
    start, end = seg[:-1], seg[1:]
    off_blk = jnp.clip(start // te, 0, nkb - 1).astype(jnp.int32)
    cnt_blk = jnp.where(end > start, (end - 1) // te + 1 - off_blk, 0).astype(jnp.int32)

    # Static edge-axis grid extent: max blocks any node tile visits.
    # (Concrete here; jitting this wrapper would need a static upper bound.)
    max_kb = max(1, int(jnp.max(cnt_blk)))

    # Pad to tile multiples.  Padded edges get dst = -1 (never match a node).
    h_p = jnp.zeros((n_pad, ndim_in), jnp.float32).at[:N].set(h32)
    xmsg_p = jnp.zeros((e_pad, kmsg + 1), compute_dtype).at[:E].set(xmsg)
    dst_p = jnp.full((1, e_pad), -1, jnp.int32).at[0, :E].set(dst_s)

    # Params: transpose for x @ W^T, split W_apply column-wise, zero-pad lanes;
    # the degree column is a 1 at (row kmsg, lane ndim_out) of W_msg^T.
    wmsg_t = jnp.zeros((kmsg + 1, dpad), jnp.float32)
    wmsg_t = wmsg_t.at[:kmsg, :ndim_out].set(W_msg.T)
    wmsg_t = wmsg_t.at[kmsg, ndim_out].set(1.0)
    wa1_t = jnp.zeros((ndim_in, dpad), jnp.float32).at[:, :ndim_out].set(
        W_apply[:, :ndim_in].T)
    wa2_t = jnp.zeros((dpad, dpad), jnp.float32).at[:ndim_out, :ndim_out].set(
        W_apply[:, ndim_in:].T)
    bmsg = jnp.zeros((1, dpad), jnp.float32).at[0, :ndim_out].set(b_msg)
    bap = jnp.zeros((1, dpad), jnp.float32).at[0, :ndim_out].set(b_apply)

    # MXU operands in compute_dtype; biases / epilogue stay f32.
    h_c = h_p.astype(compute_dtype)
    wmsg_c = wmsg_t.astype(compute_dtype)
    wa1_c = wa1_t.astype(compute_dtype)
    wa2_c = wa2_t.astype(compute_dtype)

    grid = (n_tiles, max_kb)

    def edge_block(i, k, off, cnt):
        # Steps past this tile's own block count clamp to its last block, so the
        # block index repeats and the pipeline skips the DMA for those steps.
        return off[i] + jnp.minimum(k, jnp.maximum(cnt[i] - 1, 0))

    kernel = functools.partial(
        _sage_kernel, ndim_out=ndim_out,
        approx_recip=jnp.dtype(compute_dtype) != jnp.dtype(jnp.float32))

    itemsize = jnp.dtype(compute_dtype).itemsize
    flops = (2 * e_pad * (kmsg + 1) * dpad            # messages (~once per edge)
             + 2 * e_pad * tn * dpad                  # aggregation
             + 2 * n_pad * (ndim_in + dpad) * dpad)   # apply
    bytes_accessed = (xmsg_p.size * itemsize + dst_p.size * 4
                      + h_c.size * itemsize
                      + (wmsg_c.size + wa1_c.size + wa2_c.size) * itemsize
                      + (bmsg.size + bap.size) * 4
                      + n_pad * dpad * jnp.dtype(out_dtype).itemsize)

    out = pl.pallas_call(
        kernel,
        out_shape=jax.ShapeDtypeStruct((n_pad, dpad), out_dtype),
        grid_spec=pltpu.PrefetchScalarGridSpec(
            num_scalar_prefetch=2,
            grid=grid,
            in_specs=[
                pl.BlockSpec((1, te),                                          # dst (sorted)
                             lambda i, k, off, cnt: (0, edge_block(i, k, off, cnt))),
                pl.BlockSpec((te, kmsg + 1),                                   # [h_src || h_e || 1]
                             lambda i, k, off, cnt: (edge_block(i, k, off, cnt), 0)),
                pl.BlockSpec((kmsg + 1, dpad), lambda i, k, off, cnt: (0, 0)), # W_msg^T (+deg col)
                pl.BlockSpec((1, dpad), lambda i, k, off, cnt: (0, 0)),        # b_msg
                pl.BlockSpec((tn, ndim_in), lambda i, k, off, cnt: (i, 0)),    # h
                pl.BlockSpec((ndim_in, dpad), lambda i, k, off, cnt: (0, 0)),  # W_apply[:, :in]^T
                pl.BlockSpec((dpad, dpad), lambda i, k, off, cnt: (0, 0)),     # W_apply[:, in:]^T
                pl.BlockSpec((1, dpad), lambda i, k, off, cnt: (0, 0)),        # b_apply
            ],
            out_specs=pl.BlockSpec((tn, dpad), lambda i, k, off, cnt: (i, 0)),
            scratch_shapes=[
                pltpu.VMEM((tn, dpad), jnp.float32),   # message-sum + degree accumulator
            ],
        ),
        compiler_params=pltpu.CompilerParams(
            dimension_semantics=("parallel", "arbitrary"),
            vmem_limit_bytes=vmem_limit_bytes,         # v7x-safe (64 MiB physical)
        ),
        cost_estimate=pl.CostEstimate(
            flops=int(flops), transcendentals=0,
            bytes_accessed=int(bytes_accessed)),
    )(off_blk, cnt_blk, dst_p, xmsg_p, wmsg_c, bmsg, h_c, wa1_c, wa2_c, bap)

    return out[:N, :ndim_out].reshape(N, 1, ndim_out)


def _reference(nfeats, efeats, src, dst, params):
    """Pure-JAX f32 reference mirroring the PyTorch/DGL forward."""
    W_msg, b_msg, W_apply, b_apply = params
    N = nfeats.shape[0]
    ndim_in = nfeats.shape[-1]
    ndim_out = W_msg.shape[0]
    h = nfeats.reshape(N, ndim_in)
    e = efeats.reshape(efeats.shape[0], efeats.shape[-1])
    m = jnp.concatenate([h[src], e], axis=1) @ W_msg.T + b_msg
    summed = jnp.zeros((N, ndim_out), jnp.float32).at[dst].add(m)
    deg = jnp.zeros((N, 1), jnp.float32).at[dst].add(1.0)
    h_neigh = jnp.where(deg > 0, summed / jnp.maximum(deg, 1.0), 0.0)
    z = jnp.concatenate([h, h_neigh], axis=1) @ W_apply.T + b_apply
    return jnp.maximum(z, 0.0).reshape(N, 1, ndim_out)


if __name__ == "__main__":
    # Small shapes consistent with the module: ndim_in=8, edims=8, ndim_out=16.
    N, E, ndim_in, edims, ndim_out = 16, 64, 8, 8, 16

    key = jax.random.PRNGKey(0)
    k_n, k_e, k_wm, k_bm, k_wa, k_ba = jax.random.split(key, 6)

    nfeats = jax.random.normal(k_n, (N, 1, ndim_in), jnp.float32)
    efeats = jax.random.normal(k_e, (E, 1, edims), jnp.float32)

    # Deterministic synthetic graph.
    idx = jnp.arange(E, dtype=jnp.int32)
    src = idx % N
    dst = (3 * idx + 1) % N

    # Deterministic parameter init (uniform, like nn.Linear's default scale).
    s_msg = 1.0 / jnp.sqrt(ndim_in + edims)
    s_app = 1.0 / jnp.sqrt(ndim_in + ndim_out)
    W_msg = jax.random.uniform(k_wm, (ndim_out, ndim_in + edims), jnp.float32, -s_msg, s_msg)
    b_msg = jax.random.uniform(k_bm, (ndim_out,), jnp.float32, -s_msg, s_msg)
    W_apply = jax.random.uniform(k_wa, (ndim_out, ndim_in + ndim_out), jnp.float32, -s_app, s_app)
    b_apply = jax.random.uniform(k_ba, (ndim_out,), jnp.float32, -s_app, s_app)
    params = (W_msg, b_msg, W_apply, b_apply)

    ref = _reference(nfeats, efeats, src, dst, params)

    # 1) f32 MXU path: tight match against the f32 reference (exact reciprocal).
    out_f32 = jax.block_until_ready(
        sage_layer_pallas(nfeats, efeats, src, dst, params,
                          compute_dtype=jnp.float32))
    assert out_f32.shape == (N, 1, ndim_out), out_f32.shape
    assert jnp.allclose(out_f32, ref, atol=1e-4, rtol=1e-4), "f32 mismatch"

    # 2) bf16 MXU path (default): looser tolerance for bf16 operand rounding
    #    of the per-edge messages (accumulation stays f32) and approx 1/deg.
    out_bf16 = jax.block_until_ready(
        sage_layer_pallas(nfeats, efeats, src, dst, params))
    assert jnp.allclose(out_bf16, ref, atol=8e-2, rtol=8e-2), "bf16 mismatch"

    # 3) Multi-tile grid: several node tiles with differing per-tile edge-block
    #    counts (exercising the scalar-prefetched ranges + skip guard), plus
    #    zero-degree nodes (only even nodes receive edges) for init/finalize.
    N2, E2 = 24, 300
    kn2, ke2 = jax.random.split(jax.random.PRNGKey(1), 2)
    nfeats2 = jax.random.normal(kn2, (N2, 1, ndim_in), jnp.float32)
    efeats2 = jax.random.normal(ke2, (E2, 1, edims), jnp.float32)
    idx2 = jnp.arange(E2, dtype=jnp.int32)
    src2 = (7 * idx2) % N2
    dst2 = (2 * idx2) % N2
    ref2 = _reference(nfeats2, efeats2, src2, dst2, params)
    out2 = jax.block_until_ready(
        sage_layer_pallas(nfeats2, efeats2, src2, dst2, params,
                          compute_dtype=jnp.float32, tn=8, te=128))
    assert jnp.allclose(out2, ref2, atol=1e-4, rtol=1e-4), "multi-tile mismatch"

    print("KERNEL_OK")
</pallas_src>

<mosaic_0001>
module attributes {stable_mosaic.version = 11 : i64} {
  func.func @_sage_kernel(%arg0: i32, %arg1: i32, %arg2: memref<2xi32, #tpu.memory_space<smem>>, %arg3: memref<2xi32, #tpu.memory_space<smem>>, %arg4: memref<1x128xi32, #tpu.memory_space<vmem>>, %arg5: memref<128x17xf32, #tpu.memory_space<vmem>>, %arg6: memref<17x128xf32, #tpu.memory_space<vmem>>, %arg7: memref<1x128xf32, #tpu.memory_space<vmem>>, %arg8: memref<8x8xf32, #tpu.memory_space<vmem>>, %arg9: memref<8x128xf32, #tpu.memory_space<vmem>>, %arg10: memref<128x128xf32, #tpu.memory_space<vmem>>, %arg11: memref<1x128xf32, #tpu.memory_space<vmem>>, %arg12: memref<8x128xf32, #tpu.memory_space<vmem>>, %arg13: memref<8x128xf32, #tpu.memory_space<vmem>>) attributes {dimension_semantics = [#tpu.dimension_semantics<parallel>, #tpu.dimension_semantics<arbitrary>], iteration_bounds = array<i64: 2, 1>, scalar_prefetch = 2 : i64, scratch_operands = 1 : i64, tpu.core_type = #tpu.core_type<tc>, window_params = [{transform_indices = @transform_0, window_bounds = array<i64: 1, 128>}, {transform_indices = @transform_1, window_bounds = array<i64: 128, 17>}, {pipeline_mode = #tpu.pipeline_mode<synchronous>, transform_indices = @transform_2, window_bounds = array<i64: 17, 128>}, {pipeline_mode = #tpu.pipeline_mode<synchronous>, transform_indices = @transform_3, window_bounds = array<i64: 1, 128>}, {transform_indices = @transform_4, window_bounds = array<i64: 8, 8>}, {pipeline_mode = #tpu.pipeline_mode<synchronous>, transform_indices = @transform_5, window_bounds = array<i64: 8, 128>}, {pipeline_mode = #tpu.pipeline_mode<synchronous>, transform_indices = @transform_6, window_bounds = array<i64: 128, 128>}, {pipeline_mode = #tpu.pipeline_mode<synchronous>, transform_indices = @transform_7, window_bounds = array<i64: 1, 128>}, {transform_indices = @transform_8, window_bounds = array<i64: 8, 128>}]} {
    %c0_i32 = arith.constant 0 : i32
    %0 = arith.cmpi eq, %arg1, %c0_i32 : i32
    %1 = arith.extui %0 : i1 to i32
    %c0_i32_0 = arith.constant 0 : i32
    %2 = arith.cmpi ne, %1, %c0_i32_0 : i32
    scf.if %2 {
      %cst = arith.constant 0.000000e+00 : f32
      %11 = vector.broadcast %cst : f32 to vector<8x128xf32>
      %c0 = arith.constant 0 : index
      %c0_4 = arith.constant 0 : index
      %12 = vector.load %arg13[%c0, %c0_4] : memref<8x128xf32, #tpu.memory_space<vmem>>, vector<8x128xf32>
      tpu.vector_store %arg13[%c0, %c0_4], %11 {strides = array<i32>} : memref<8x128xf32, #tpu.memory_space<vmem>>, vector<8x128xf32>,
    } else {
    }
    %3 = arith.index_cast %arg0 : i32 to index
    %4 = memref.load %arg3[%3] : memref<2xi32, #tpu.memory_space<smem>>
    %5 = arith.cmpi slt, %arg1, %4 : i32
    %6 = arith.extui %5 : i1 to i32
    %c0_i32_1 = arith.constant 0 : i32
    %7 = arith.cmpi ne, %6, %c0_i32_1 : i32
    scf.if %7 {
      %c0 = arith.constant 0 : index
      %c0_4 = arith.constant 0 : index
      %11 = vector.load %arg4[%c0, %c0_4] : memref<1x128xi32, #tpu.memory_space<vmem>>, vector<1x128xi32>
      %c8_i32 = arith.constant 8 : i32
      %12 = arith.muli %arg0, %c8_i32 : i32
      %13 = vector.broadcast %12 : i32 to vector<1x128xi32>
      %14 = arith.subi %11, %13 : vector<1x128xi32>
      %15 = tpu.iota {dimensions = array<i32: 0>} : vector<8x128xi32>
      %16 = vector.broadcast %14 : vector<1x128xi32> to vector<8x128xi32>
      %17 = arith.cmpi eq, %15, %16 : vector<8x128xi32>
      %18 = arith.extui %17 : vector<8x128xi1> to vector<8x128xi32>
      %19 = arith.sitofp %18 : vector<8x128xi32> to vector<8x128xf32>
      %c0_5 = arith.constant 0 : index
      %c0_6 = arith.constant 0 : index
      %20 = vector.load %arg5[%c0_5, %c0_6] : memref<128x17xf32, #tpu.memory_space<vmem>>, vector<128x17xf32>
      %c0_7 = arith.constant 0 : index
      %c0_8 = arith.constant 0 : index
      %21 = vector.load %arg6[%c0_7, %c0_8] : memref<17x128xf32, #tpu.memory_space<vmem>>, vector<17x128xf32>
      %cst = arith.constant dense<0.000000e+00> : vector<128x128xf32>
      %22 = tpu.matmul %20, %21, %cst {dimension_numbers = #tpu.dot_dimension_numbers<[1], [0], [0], [1], [0, 0, 1, 1], [], []>} : vector<128x17xf32>, vector<17x128xf32>, vector<128x128xf32> -> vector<128x128xf32>
      %c0_9 = arith.constant 0 : index
      %c0_10 = arith.constant 0 : index
      %23 = vector.load %arg13[%c0_9, %c0_10] : memref<8x128xf32, #tpu.memory_space<vmem>>, vector<8x128xf32>
      %cst_11 = arith.constant dense<0.000000e+00> : vector<8x128xf32>
      %24 = tpu.matmul %19, %22, %cst_11 {dimension_numbers = #tpu.dot_dimension_numbers<[1], [0], [0], [1], [0, 0, 1, 1], [], []>} : vector<8x128xf32>, vector<128x128xf32>, vector<8x128xf32> -> vector<8x128xf32>
      %25 = arith.addf %23, %24 : vector<8x128xf32>
      %c0_12 = arith.constant 0 : index
      %c0_13 = arith.constant 0 : index
      %26 = vector.load %arg13[%c0_12, %c0_13] : memref<8x128xf32, #tpu.memory_space<vmem>>, vector<8x128xf32>
      tpu.vector_store %arg13[%c0_12, %c0_13], %25 {strides = array<i32>} : memref<8x128xf32, #tpu.memory_space<vmem>>, vector<8x128xf32>,
    } else {
    }
    %c0_i32_2 = arith.constant 0 : i32
    %8 = arith.cmpi eq, %arg1, %c0_i32_2 : i32
    %9 = arith.extui %8 : i1 to i32
    %c0_i32_3 = arith.constant 0 : i32
    %10 = arith.cmpi ne, %9, %c0_i32_3 : i32
    scf.if %10 {
      %c0 = arith.constant 0 : index
      %c0_4 = arith.constant 0 : index
      %11 = vector.load %arg13[%c0, %c0_4] : memref<8x128xf32, #tpu.memory_space<vmem>>, vector<8x128xf32>
      %12 = vector.extract_strided_slice %11 {offsets = [0, 16], sizes = [8, 1], strides = [1, 1]} : vector<8x128xf32> to vector<8x1xf32>
      %cst = arith.constant 0.000000e+00 : f32
      %13 = vector.broadcast %cst : f32 to vector<8x1xf32>
      %14 = arith.cmpf ogt, %12, %13 : vector<8x1xf32>
      %15 = arith.extui %14 : vector<8x1xi1> to vector<8x1xi32>
      %16 = arith.sitofp %15 : vector<8x1xi32> to vector<8x1xf32>
      %cst_5 = arith.constant 1.000000e+00 : f32
      %17 = vector.broadcast %cst_5 : f32 to vector<8x1xf32>
      %18 = arith.maximumf %12, %17 : vector<8x1xf32>
      %19 = tpu.reciprocal %18 : vector<8x1xf32> -> vector<8x1xf32>
      %20 = arith.mulf %19, %16 : vector<8x1xf32>
      %21 = vector.broadcast %20 : vector<8x1xf32> to vector<8x128xf32>
      %22 = arith.mulf %11, %21 : vector<8x128xf32>
      %c0_6 = arith.constant 0 : index
      %c0_7 = arith.constant 0 : index
      %23 = vector.load %arg7[%c0_6, %c0_7] : memref<1x128xf32, #tpu.memory_space<vmem>>, vector<1x128xf32>
      %24 = vector.broadcast %23 : vector<1x128xf32> to vector<8x128xf32>
      %25 = vector.broadcast %16 : vector<8x1xf32> to vector<8x128xf32>
      %26 = arith.mulf %24, %25 : vector<8x128xf32>
      %27 = arith.addf %22, %26 : vector<8x128xf32>
      %c0_8 = arith.constant 0 : index
      %c0_9 = arith.constant 0 : index
      %28 = vector.load %arg8[%c0_8, %c0_9] : memref<8x8xf32, #tpu.memory_space<vmem>>, vector<8x8xf32>
      %c0_10 = arith.constant 0 : index
      %c0_11 = arith.constant 0 : index
      %29 = vector.load %arg9[%c0_10, %c0_11] : memref<8x128xf32, #tpu.memory_space<vmem>>, vector<8x128xf32>
      %cst_12 = arith.constant dense<0.000000e+00> : vector<8x128xf32>
      %30 = tpu.matmul %28, %29, %cst_12 {dimension_numbers = #tpu.dot_dimension_numbers<[1], [0], [0], [1], [0, 0, 1, 1], [], []>} : vector<8x8xf32>, vector<8x128xf32>, vector<8x128xf32> -> vector<8x128xf32>
      %c0_13 = arith.constant 0 : index
      %c0_14 = arith.constant 0 : index
      %31 = vector.load %arg10[%c0_13, %c0_14] : memref<128x128xf32, #tpu.memory_space<vmem>>, vector<128x128xf32>
      %cst_15 = arith.constant dense<0.000000e+00> : vector<8x128xf32>
      %32 = tpu.matmul %27, %31, %cst_15 {dimension_numbers = #tpu.dot_dimension_numbers<[1], [0], [0], [1], [0, 0, 1, 1], [], []>} : vector<8x128xf32>, vector<128x128xf32>, vector<8x128xf32> -> vector<8x128xf32>
      %33 = arith.addf %30, %32 : vector<8x128xf32>
      %c0_16 = arith.constant 0 : index
      %c0_17 = arith.constant 0 : index
      %34 = vector.load %arg11[%c0_16, %c0_17] : memref<1x128xf32, #tpu.memory_space<vmem>>, vector<1x128xf32>
      %35 = vector.broadcast %34 : vector<1x128xf32> to vector<8x128xf32>
      %36 = arith.addf %33, %35 : vector<8x128xf32>
      %cst_18 = arith.constant 0.000000e+00 : f32
      %37 = vector.broadcast %cst_18 : f32 to vector<8x128xf32>
      %38 = arith.maximumf %36, %37 : vector<8x128xf32>
      %c0_19 = arith.constant 0 : index
      %c0_20 = arith.constant 0 : index
      %39 = vector.load %arg12[%c0_19, %c0_20] : memref<8x128xf32, #tpu.memory_space<vmem>>, vector<8x128xf32>
      tpu.vector_store %arg12[%c0_19, %c0_20], %38 {strides = array<i32>} : memref<8x128xf32, #tpu.memory_space<vmem>>, vector<8x128xf32>,
    } else {
    }
    return
  }
  func.func @transform_0(%arg0: i32, %arg1: i32, %arg2: memref<2xi32, #tpu.memory_space<smem>>, %arg3: memref<2xi32, #tpu.memory_space<smem>>) -> (i32, i32) {
    %0 = arith.index_cast %arg0 : i32 to index
    %1 = memref.load %arg2[%0] : memref<2xi32, #tpu.memory_space<smem>>
    %2 = arith.index_cast %arg0 : i32 to index
    %3 = memref.load %arg3[%2] : memref<2xi32, #tpu.memory_space<smem>>
    %c1_i32 = arith.constant 1 : i32
    %4 = arith.subi %3, %c1_i32 : i32
    %c0_i32 = arith.constant 0 : i32
    %5 = arith.maxsi %4, %c0_i32 : i32
    %6 = arith.minsi %arg1, %5 : i32
    %7 = arith.addi %1, %6 : i32
    %c0_i32_0 = arith.constant 0 : i32
    %c0_i32_1 = arith.constant 0 : i32
    return %c0_i32_0, %7 : i32, i32
  }
  func.func @transform_1(%arg0: i32, %arg1: i32, %arg2: memref<2xi32, #tpu.memory_space<smem>>, %arg3: memref<2xi32, #tpu.memory_space<smem>>) -> (i32, i32) {
    %0 = arith.index_cast %arg0 : i32 to index
    %1 = memref.load %arg2[%0] : memref<2xi32, #tpu.memory_space<smem>>
    %2 = arith.index_cast %arg0 : i32 to index
    %3 = memref.load %arg3[%2] : memref<2xi32, #tpu.memory_space<smem>>
    %c1_i32 = arith.constant 1 : i32
    %4 = arith.subi %3, %c1_i32 : i32
    %c0_i32 = arith.constant 0 : i32
    %5 = arith.maxsi %4, %c0_i32 : i32
    %6 = arith.minsi %arg1, %5 : i32
    %7 = arith.addi %1, %6 : i32
    %c0_i32_0 = arith.constant 0 : i32
    %c0_i32_1 = arith.constant 0 : i32
    return %7, %c0_i32_0 : i32, i32
  }
  func.func @transform_2(%arg0: i32, %arg1: i32, %arg2: memref<2xi32, #tpu.memory_space<smem>>, %arg3: memref<2xi32, #tpu.memory_space<smem>>) -> (i32, i32) {
    %c0_i32 = arith.constant 0 : i32
    %c0_i32_0 = arith.constant 0 : i32
    %c0_i32_1 = arith.constant 0 : i32
    return %c0_i32, %c0_i32_0 : i32, i32
  }
  func.func @transform_3(%arg0: i32, %arg1: i32, %arg2: memref<2xi32, #tpu.memory_space<smem>>, %arg3: memref<2xi32, #tpu.memory_space<smem>>) -> (i32, i32) {
    %c0_i32 = arith.constant 0 : i32
    %c0_i32_0 = arith.constant 0 : i32
    %c0_i32_1 = arith.constant 0 : i32
    return %c0_i32, %c0_i32_0 : i32, i32
  }
  func.func @transform_4(%arg0: i32, %arg1: i32, %arg2: memref<2xi32, #tpu.memory_space<smem>>, %arg3: memref<2xi32, #tpu.memory_space<smem>>) -> (i32, i32) {
    %c0_i32 = arith.constant 0 : i32
    %c0_i32_0 = arith.constant 0 : i32
    return %arg0, %c0_i32 : i32, i32
  }
  func.func @transform_5(%arg0: i32, %arg1: i32, %arg2: memref<2xi32, #tpu.memory_space<smem>>, %arg3: memref<2xi32, #tpu.memory_space<smem>>) -> (i32, i32) {
    %c0_i32 = arith.constant 0 : i32
    %c0_i32_0 = arith.constant 0 : i32
    %c0_i32_1 = arith.constant 0 : i32
    return %c0_i32, %c0_i32_0 : i32, i32
  }
  func.func @transform_6(%arg0: i32, %arg1: i32, %arg2: memref<2xi32, #tpu.memory_space<smem>>, %arg3: memref<2xi32, #tpu.memory_space<smem>>) -> (i32, i32) {
    %c0_i32 = arith.constant 0 : i32
    %c0_i32_0 = arith.constant 0 : i32
    %c0_i32_1 = arith.constant 0 : i32
    return %c0_i32, %c0_i32_0 : i32, i32
  }
  func.func @transform_7(%arg0: i32, %arg1: i32, %arg2: memref<2xi32, #tpu.memory_space<smem>>, %arg3: memref<2xi32, #tpu.memory_space<smem>>) -> (i32, i32) {
    %c0_i32 = arith.constant 0 : i32
    %c0_i32_0 = arith.constant 0 : i32
    %c0_i32_1 = arith.constant 0 : i32
    return %c0_i32, %c0_i32_0 : i32, i32
  }
  func.func @transform_8(%arg0: i32, %arg1: i32, %arg2: memref<2xi32, #tpu.memory_space<smem>>, %arg3: memref<2xi32, #tpu.memory_space<smem>>) -> (i32, i32) {
    %c0_i32 = arith.constant 0 : i32
    %c0_i32_0 = arith.constant 0 : i32
    return %arg0, %c0_i32 : i32, i32
  }
}

</mosaic_0001>

<llo_original>
// kernel: tpu_custom_call.1
$region0: #{tpu_custom_call.1}
  #allocation0 [shape = 'u32[]', space=smem, size = 0x4, offset = 0x4, fixed_abs, tag = 'smem constant byte address 0x4 - core index']
  #allocation1 [shape = 'u32[144,128]{1,0:T(1,128)}', space=vmem, size = 0x12000, scoped, tag = 'internal scratch']
  #allocation2 [shape = 'f32[8,128]{1,0:T(8,128)}', space=vmem, size = 0x1000, scoped, tag = 'scratch operand']
  #allocation3 [shape = 's32[1]{0}', space=sflag, size = 0x4, scoped, tag = 'scoped memory for tpu_custom_call.1']
  #allocation4 [shape = 'u8[512]{0}', space=smem, size = 0x200, scoped, tag = 'prefetched SMEM operand 0']
  #allocation5 [shape = 'u8[512]{0}', space=smem, size = 0x200, scoped, tag = 'prefetched SMEM operand 1']
  %s0 = inlined_call_operand.vmem [shape: s32[2], index: 0, kind: input, shape index: {}]
  %s1 = inlined_call_operand.vmem [shape: s32[2], index: 1, kind: input, shape index: {}]
  %s2 = inlined_call_operand.vmem [shape: s32[1,128], index: 2, kind: input, shape index: {}]
  %s3 = inlined_call_operand.vmem [shape: f32[128,17], index: 3, kind: input, shape index: {}]
  %s4 = inlined_call_operand.vmem [shape: f32[17,128], index: 4, kind: input, shape index: {}]
  %s5 = inlined_call_operand.vmem [shape: f32[1,128], index: 5, kind: input, shape index: {}]
  %s6 = inlined_call_operand.vmem [shape: f32[16,8], index: 6, kind: input, shape index: {}]
  %s7 = inlined_call_operand.vmem [shape: f32[8,128], index: 7, kind: input, shape index: {}]
  %s8 = inlined_call_operand.vmem [shape: f32[128,128], index: 8, kind: input, shape index: {}]
  %s9 = inlined_call_operand.vmem [shape: f32[1,128], index: 9, kind: input, shape index: {}]
  %s10 = inlined_call_operand.hbm [shape: f32[16,128], index: 10, kind: output, shape index: {}]
  %s11 = sld [smem:[#allocation0]]
  $region77: #{tpu_custom_call.1} parent=0
    _
  %s13 = ssub.s32 1, %s11
  %s14 = scalar_select 0, %s13, %s11
  %s15 = sshll.u32 %s0, 4
  %s16 = int_to_ptr.vmem [resolvable:$true] %s15
  %18 = dma.vmem_to_smem %s16, 16, [#allocation4], [#allocation3]
  %s19 = sshll.u32 %s1, 4
  %s20 = int_to_ptr.vmem [resolvable:$true] %s19
  %22 = dma.vmem_to_smem %s20, 16, [#allocation5], [#allocation3]
  %23 = dma.done [#allocation3], 32
  %24 = sfence
  $region1: #{tpu_custom_call.1} parent=0
    #allocation6 [shape = 'u8[8192]{0}', space=vmem, size = 0x2000, scoped, tag = 'output window, operand 0']
    #allocation7 [shape = 's32[2]{0}', space=sflag, size = 0x8, scoped, tag = 'scoped memory for tpu_custom_call.1']
    %25 = vsyncpa [#allocation7], 0
    %s26 = scalar_lea.sflag [#allocation7], 1
    %27 = vsyncpa %s26, 0
    loop: start=0, step=1, limit=4
    $region2: #{tpu_custom_call.1} parent=1 // loop_pre_header
      _
    $region3: #{tpu_custom_call.1} parent=1 // loop_header
      %s29 = sphi 0, %s33
      %p30 = scmp.ge.s32.totalorder %s29, 4
      %s36 = sphi 0, %s48
      %s37 = sphi 0, %s44
      %s38 = sphi 0, %s36
      %s39 = sphi 0, %s37
      %s40 = sphi 0, %s38
      %s41 = sphi 0, %s39
      %s67 = sphi 0, %s69
      %s70 = sphi 0, %s67
      %s71 = sphi 0, %s70
      %s87 = sphi 0, %s71
      %s109 = sphi 0, %s111
      %s112 = sphi 0, %s109
      %s113 = sphi 0, %s112
      %s129 = sphi 0, %s113
      %s133 = sphi 0, %s133
      %s135 = sphi 0, %s133
      %s136 = sphi 0, %s135
      %s150 = sphi 0, %s136
      %s154 = sphi 0, %s154
      %s156 = sphi 0, %s154
      %s157 = sphi 0, %s156
      %s171 = sphi 0, %s157
      %s177 = sphi 0, %s179
      %s180 = sphi 0, %s177
      %s181 = sphi 0, %s180
      %s197 = sphi 0, %s181
      %s201 = sphi 0, %s201
      %s203 = sphi 0, %s201
      %s204 = sphi 0, %s203
      %s218 = sphi 0, %s204
      %s222 = sphi 0, %s222
      %s224 = sphi 0, %s222
      %s225 = sphi 0, %s224
      %s239 = sphi 0, %s225
      %s243 = sphi 0, %s243
      %s245 = sphi 0, %s243
      %s246 = sphi 0, %s245
      %s260 = sphi 0, %s246
      %s266 = sphi 0, %s268
      %s269 = sphi 0, %s266
      %s270 = sphi 0, %s269
      %s286 = sphi 0, %s270
    $region4: #{tpu_custom_call.1} parent=1 // loop_header_branch
      %32 = sbr.rel (%p30) target = $region8
    $region5: #{tpu_custom_call.1} parent=1 // loop_body
      %s34 = ssub.s32 %s29, 1
      %s35 = ssub.s32 %s29, 2
      %s42 = sadd.s32 1, %s37
      %p43 = scmp.ge.s32.totalorder %s42, 1
      %s44 = scalar_select %p43, 0, %s42
      %s45 = sadd.s32 1, %s36
      %s46 = scalar_select %p43, %s45, %s36
      %p47 = scmp.ge.s32.totalorder %s46, 2
      %s48 = scalar_select %p47, 0, %s46
      %s49 = sld [smem:[#allocation4 + %s36]]
      %s50 = sld [smem:[#allocation5 + %s36]]
      %s51 = ssub.s32 %s50, 1
      %p52 = scmp.gt.s32.totalorder %s51, 0
      %s53 = scalar_select %p52, %s51, 0
      %p54 = scmp.lt.s32.totalorder %s37, %s53
      %s55 = scalar_select %p54, %s37, %s53
      %s56 = sadd.s32 %s49, %s55
      %s57 = sld [smem:[#allocation4 + %s48]]
      %s58 = sld [smem:[#allocation5 + %s48]]
      %s59 = ssub.s32 %s58, 1
      %p60 = scmp.gt.s32.totalorder %s59, 0
      %s61 = scalar_select %p60, %s59, 0
      %p62 = scmp.lt.s32.totalorder %s44, %s61
      %s63 = scalar_select %p62, %s44, %s61
      %s64 = sadd.s32 %s57, %s63
      %s65 = ssub.s32 %s56, %s64
      %p66 = scmp.eq.s32.totalorder %s65, 0
      %s68 = sadd.s32 %s67, 1
      %s69 = scalar_select %p66, %s67, %s68
      %p72 = pneg %p66
      %p73 = scmp.eq.s32.totalorder %s29, 1
      %p74 = por %p72, %p73
      %p75 = scmp.ne.s32.totalorder %s67, %s70
      %p76 = scmp.eq.s32.totalorder %s29, 0
      %p77 = por %p75, %p76
      %p78 = scmp.ne.s32.totalorder %s67, %s70
      %p79 = scmp.eq.s32.totalorder %s34, 1
      %p80 = por %p78, %p79
      %p81 = scmp.ne.s32.totalorder %s70, %s71
      %p82 = scmp.eq.s32.totalorder %s34, 0
      %p83 = por %p81, %p82
      %p84 = scmp.ne.s32.totalorder %s70, %s71
      %p85 = scmp.eq.s32.totalorder %s35, 1
      %p86 = por %p84, %p85
      %p88 = scmp.ne.s32.totalorder %s71, %s87
      %p89 = scmp.eq.s32.totalorder %s35, 0
      %p90 = por %p88, %p89
      %s91 = sld [smem:[#allocation4 + %s36]]
      %s92 = sld [smem:[#allocation5 + %s36]]
      %s93 = ssub.s32 %s92, 1
      %p94 = scmp.gt.s32.totalorder %s93, 0
      %s95 = scalar_select %p94, %s93, 0
      %p96 = scmp.lt.s32.totalorder %s37, %s95
      %s97 = scalar_select %p96, %s37, %s95
      %s98 = sadd.s32 %s91, %s97
      %s99 = sld [smem:[#allocation4 + %s48]]
      %s100 = sld [smem:[#allocation5 + %s48]]
      %s101 = ssub.s32 %s100, 1
      %p102 = scmp.gt.s32.totalorder %s101, 0
      %s103 = scalar_select %p102, %s101, 0
      %p104 = scmp.lt.s32.totalorder %s44, %s103
      %s105 = scalar_select %p104, %s44, %s103
      %s106 = sadd.s32 %s99, %s105
      %s107 = ssub.s32 %s98, %s106
      %p108 = scmp.eq.s32.totalorder %s107, 0
      %s110 = sadd.s32 %s109, 1
      %s111 = scalar_select %p108, %s109, %s110
      %p114 = pneg %p108
      %p115 = scmp.eq.s32.totalorder %s29, 1
      %p116 = por %p114, %p115
      %p117 = scmp.ne.s32.totalorder %s109, %s112
      %p118 = scmp.eq.s32.totalorder %s29, 0
      %p119 = por %p117, %p118
      %p120 = scmp.ne.s32.totalorder %s109, %s112
      %p121 = scmp.eq.s32.totalorder %s34, 1
      %p122 = por %p120, %p121
      %p123 = scmp.ne.s32.totalorder %s112, %s113
      %p124 = scmp.eq.s32.totalorder %s34, 0
      %p125 = por %p123, %p124
      %p126 = scmp.ne.s32.totalorder %s112, %s113
      %p127 = scmp.eq.s32.totalorder %s35, 1
      %p128 = por %p126, %p127
      %p130 = scmp.ne.s32.totalorder %s113, %s129
      %p131 = scmp.eq.s32.totalorder %s35, 0
      %p132 = por %p130, %p131
      %s134 = sadd.s32 %s133, 1
      %p137 = scmp.eq.s32.totalorder %s29, 1
      %p138 = scmp.ne.s32.totalorder %s133, %s135
      %p139 = scmp.eq.s32.totalorder %s29, 0
      %p140 = por %p138, %p139
      %p141 = scmp.ne.s32.totalorder %s133, %s135
      %p142 = scmp.eq.s32.totalorder %s34, 1
      %p143 = por %p141, %p142
      %p144 = scmp.ne.s32.totalorder %s135, %s136
      %p145 = scmp.eq.s32.totalorder %s34, 0
      %p146 = por %p144, %p145
      %p147 = scmp.ne.s32.totalorder %s135, %s136
      %p148 = scmp.eq.s32.totalorder %s35, 1
      %p149 = por %p147, %p148
      %p151 = scmp.ne.s32.totalorder %s136, %s150
      %p152 = scmp.eq.s32.totalorder %s35, 0
      %p153 = por %p151, %p152
      %s155 = sadd.s32 %s154, 1
      %p158 = scmp.eq.s32.totalorder %s29, 1
      %p159 = scmp.ne.s32.totalorder %s154, %s156
      %p160 = scmp.eq.s32.totalorder %s29, 0
      %p161 = por %p159, %p160
      %p162 = scmp.ne.s32.totalorder %s154, %s156
      %p163 = scmp.eq.s32.totalorder %s34, 1
      %p164 = por %p162, %p163
      %p165 = scmp.ne.s32.totalorder %s156, %s157
      %p166 = scmp.eq.s32.totalorder %s34, 0
      %p167 = por %p165, %p166
      %p168 = scmp.ne.s32.totalorder %s156, %s157
      %p169 = scmp.eq.s32.totalorder %s35, 1
      %p170 = por %p168, %p169
      %p172 = scmp.ne.s32.totalorder %s157, %s171
      %p173 = scmp.eq.s32.totalorder %s35, 0
      %p174 = por %p172, %p173
      %s175 = ssub.s32 %s36, %s48
      %p176 = scmp.eq.s32.totalorder %s175, 0
      %s178 = sadd.s32 %s177, 1
      %s179 = scalar_select %p176, %s177, %s178
      %p182 = pneg %p176
      %p183 = scmp.eq.s32.totalorder %s29, 1
      %p184 = por %p182, %p183
      %p185 = scmp.ne.s32.totalorder %s177, %s180
      %p186 = scmp.eq.s32.totalorder %s29, 0
      %p187 = por %p185, %p186
      %p188 = scmp.ne.s32.totalorder %s177, %s180
      %p189 = scmp.eq.s32.totalorder %s34, 1
      %p190 = por %p188, %p189
      %p191 = scmp.ne.s32.totalorder %s180, %s181
      %p192 = scmp.eq.s32.totalorder %s34, 0
      %p193 = por %p191, %p192
      %p194 = scmp.ne.s32.totalorder %s180, %s181
      %p195 = scmp.eq.s32.totalorder %s35, 1
      %p196 = por %p194, %p195
      %p198 = scmp.ne.s32.totalorder %s181, %s197
      %p199 = scmp.eq.s32.totalorder %s35, 0
      %p200 = por %p198, %p199
      %s202 = sadd.s32 %s201, 1
      %p205 = scmp.eq.s32.totalorder %s29, 1
      %p206 = scmp.ne.s32.totalorder %s201, %s203
      %p207 = scmp.eq.s32.totalorder %s29, 0
      %p208 = por %p206, %p207
      %p209 = scmp.ne.s32.totalorder %s201, %s203
      %p210 = scmp.eq.s32.totalorder %s34, 1
      %p211 = por %p209, %p210
      %p212 = scmp.ne.s32.totalorder %s203, %s204
      %p213 = scmp.eq.s32.totalorder %s34, 0
      %p214 = por %p212, %p213
      %p215 = scmp.ne.s32.totalorder %s203, %s204
      %p216 = scmp.eq.s32.totalorder %s35, 1
      %p217 = por %p215, %p216
      %p219 = scmp.ne.s32.totalorder %s204, %s218
      %p220 = scmp.eq.s32.totalorder %s35, 0
      %p221 = por %p219, %p220
      %s223 = sadd.s32 %s222, 1
      %p226 = scmp.eq.s32.totalorder %s29, 1
      %p227 = scmp.ne.s32.totalorder %s222, %s224
      %p228 = scmp.eq.s32.totalorder %s29, 0
      %p229 = por %p227, %p228
      %p230 = scmp.ne.s32.totalorder %s222, %s224
      %p231 = scmp.eq.s32.totalorder %s34, 1
      %p232 = por %p230, %p231
      %p233 = scmp.ne.s32.totalorder %s224, %s225
      %p234 = scmp.eq.s32.totalorder %s34, 0
      %p235 = por %p233, %p234
      %p236 = scmp.ne.s32.totalorder %s224, %s225
      %p237 = scmp.eq.s32.totalorder %s35, 1
      %p238 = por %p236, %p237
      %p240 = scmp.ne.s32.totalorder %s225, %s239
      %p241 = scmp.eq.s32.totalorder %s35, 0
      %p242 = por %p240, %p241
      %s244 = sadd.s32 %s243, 1
      %p247 = scmp.eq.s32.totalorder %s29, 1
      %p248 = scmp.ne.s32.totalorder %s243, %s245
      %p249 = scmp.eq.s32.totalorder %s29, 0
      %p250 = por %p248, %p249
      %p251 = scmp.ne.s32.totalorder %s243, %s245
      %p252 = scmp.eq.s32.totalorder %s34, 1
      %p253 = por %p251, %p252
      %p254 = scmp.ne.s32.totalorder %s245, %s246
      %p255 = scmp.eq.s32.totalorder %s34, 0
      %p256 = por %p254, %p255
      %p257 = scmp.ne.s32.totalorder %s245, %s246
      %p258 = scmp.eq.s32.totalorder %s35, 1
      %p259 = por %p257, %p258
      %p261 = scmp.ne.s32.totalorder %s246, %s260
      %p262 = scmp.eq.s32.totalorder %s35, 0
      %p263 = por %p261, %p262
      %s264 = ssub.s32 %s36, %s48
      %p265 = scmp.eq.s32.totalorder %s264, 0
      %s267 = sadd.s32 %s266, 1
      %s268 = scalar_select %p265, %s266, %s267
      %p271 = pneg %p265
      %p272 = scmp.eq.s32.totalorder %s29, 1
      %p273 = por %p271, %p272
      %p274 = scmp.ne.s32.totalorder %s266, %s269
      %p275 = scmp.eq.s32.totalorder %s29, 0
      %p276 = por %p274, %p275
      %p277 = scmp.ne.s32.totalorder %s266, %s269
      %p278 = scmp.eq.s32.totalorder %s34, 1
      %p279 = por %p277, %p278
      %p280 = scmp.ne.s32.totalorder %s269, %s270
      %p281 = scmp.eq.s32.totalorder %s34, 0
      %p282 = por %p280, %p281
      %p283 = scmp.ne.s32.totalorder %s269, %s270
      %p284 = scmp.eq.s32.totalorder %s35, 1
      %p285 = por %p283, %p284
      %p287 = scmp.ne.s32.totalorder %s270, %s286
      %p288 = scmp.eq.s32.totalorder %s35, 0
      %p289 = por %p287, %p288
      %p290 = scmp.le.s32.totalorder 1, %s29
      %p291 = scmp.lt.s32.totalorder %s29, 3
      %p292 = pnand %p290, %p291
      %p293 = pneg %p292
      // Predicated region
      $region9: #{tpu_custom_call.1} parent=5 // pred_check
        _
      $region10: #{tpu_custom_call.1} parent=5 // pred_check_branch
        %295 = sbr.rel (%p292) target = $region12
      $region11: #{tpu_custom_call.1} parent=5 // pred_region
        %s296 = ssub.s32 %s29, 1
        // Predicated region
        $region13: #{tpu_custom_call.1} parent=11 // pred_check
          %p297 = pneg %p146
        $region14: #{tpu_custom_call.1} parent=11 // pred_check_branch
          %299 = sbr.rel (%p297) target = $region16
        $region15: #{tpu_custom_call.1} parent=11 // pred_region
          _
        $region16: #{tpu_custom_call.1} parent=11 // pred_fallthru
          _
        // Predicated region
        $region17: #{tpu_custom_call.1} parent=11 // pred_check
          %p300 = pneg %p167
        $region18: #{tpu_custom_call.1} parent=11 // pred_check_branch
          %302 = sbr.rel (%p300) target = $region20
        $region19: #{tpu_custom_call.1} parent=11 // pred_region
          _
        $region20: #{tpu_custom_call.1} parent=11 // pred_fallthru
          _
        // Predicated region
        $region21: #{tpu_custom_call.1} parent=11 // pred_check
          %p303 = pneg %p214
        $region22: #{tpu_custom_call.1} parent=11 // pred_check_branch
          %305 = sbr.rel (%p303) target = $region24
        $region23: #{tpu_custom_call.1} parent=11 // pred_region
          _
        $region24: #{tpu_custom_call.1} parent=11 // pred_fallthru
          _
        // Predicated region
        $region25: #{tpu_custom_call.1} parent=11 // pred_check
          %p306 = pneg %p235
        $region26: #{tpu_custom_call.1} parent=11 // pred_check_branch
          %308 = sbr.rel (%p306) target = $region28
        $region27: #{tpu_custom_call.1} parent=11 // pred_region
          _
        $region28: #{tpu_custom_call.1} parent=11 // pred_fallthru
          _
        // Predicated region
        $region29: #{tpu_custom_call.1} parent=11 // pred_check
          %p309 = pneg %p256
        $region30: #{tpu_custom_call.1} parent=11 // pred_check_branch
          %311 = sbr.rel (%p309) target = $region32
        $region31: #{tpu_custom_call.1} parent=11 // pred_region
          _
        $region32: #{tpu_custom_call.1} parent=11 // pred_fallthru
          _
      $region12: #{tpu_custom_call.1} parent=5 // pred_fallthru
        _
      %p312 = scmp.lt.s32.totalorder %s29, 2
      // Predicated region
      $region33: #{tpu_custom_call.1} parent=5 // pred_check
        %p313 = pneg %p312
      $region34: #{tpu_custom_call.1} parent=5 // pred_check_branch
        %315 = sbr.rel (%p313) target = $region36
      $region35: #{tpu_custom_call.1} parent=5 // pred_region
        // Predicated region
        $region37: #{tpu_custom_call.1} parent=35 // pred_check
          %p316 = pneg %p77
        $region38: #{tpu_custom_call.1} parent=35 // pred_check_branch
          %318 = sbr.rel (%p316) target = $region40
        $region39: #{tpu_custom_call.1} parent=35 // pred_region
          %s319 = sld [smem:[#allocation4 + %s36]]
          %s320 = sld [smem:[#allocation5 + %s36]]
          %s321 = ssub.s32 %s320, 1
          %p322 = scmp.gt.s32.totalorder %s321, 0
          %s323 = scalar_select %p322, %s321, 0
          %p324 = scmp.lt.s32.totalorder %s37, %s323
          %s325 = scalar_select %p324, %s37, %s323
          %s326 = sadd.s32 %s319, %s325
          %p327 = scmp.lt.s32.totalorder %s326, 0
          %s328 = scalar_select %p327, %s326, 0
          %s329 = scalar_lea.vmem %s2, %s328
          %s330 = sld [smem:[#allocation4 + %s36]]
          %s331 = sld [smem:[#allocation5 + %s36]]
          %s332 = ssub.s32 %s331, 1
          %p333 = scmp.gt.s32.totalorder %s332, 0
          %s334 = scalar_select %p333, %s332, 0
          %p335 = scmp.lt.s32.totalorder %s37, %s334
          %s336 = scalar_select %p335, %s37, %s334
          %s337 = sadd.s32 %s330, %s336
        $region40: #{tpu_custom_call.1} parent=35 // pred_fallthru
          _
        // Predicated region
        $region41: #{tpu_custom_call.1} parent=35 // pred_check
          %p338 = pneg %p119
        $region42: #{tpu_custom_call.1} parent=35 // pred_check_branch
          %340 = sbr.rel (%p338) target = $region44
        $region43: #{tpu_custom_call.1} parent=35 // pred_region
          %s341 = sld [smem:[#allocation4 + %s36]]
          %s342 = sld [smem:[#allocation5 + %s36]]
          %s343 = ssub.s32 %s342, 1
          %p344 = scmp.gt.s32.totalorder %s343, 0
          %s345 = scalar_select %p344, %s343, 0
          %p346 = scmp.lt.s32.totalorder %s37, %s345
          %s347 = scalar_select %p346, %s37, %s345
          %s348 = sadd.s32 %s341, %s347
          %s349 = smul.u32 16, %s348
          %p350 = scmp.lt.s32.totalorder %s349, 15
          %s351 = scalar_select %p350, %s349, 15
          %s352 = smul.addr %s351, 8
          %s353 = scalar_lea.vmem %s3, %s352
          %s354 = sld [smem:[#allocation4 + %s36]]
          %s355 = sld [smem:[#allocation5 + %s36]]
          %s356 = ssub.s32 %s355, 1
          %p357 = scmp.gt.s32.totalorder %s356, 0
          %s358 = scalar_select %p357, %s356, 0
          %p359 = scmp.lt.s32.totalorder %s37, %s358
          %s360 = scalar_select %p359, %s37, %s358
          %s361 = sadd.s32 %s354, %s360
          %s362 = smul.u32 16, %s361
        $region44: #{tpu_custom_call.1} parent=35 // pred_fallthru
          _
        // Predicated region
        $region45: #{tpu_custom_call.1} parent=35 // pred_check
          %p363 = pneg %p187
        $region46: #{tpu_custom_call.1} parent=35 // pred_check_branch
          %365 = sbr.rel (%p363) target = $region48
        $region47: #{tpu_custom_call.1} parent=35 // pred_region
          %p366 = scmp.lt.s32.totalorder %s36, 1
          %s367 = scalar_select %p366, %s36, 1
          %s368 = smul.addr %s367, 8
          %s369 = scalar_lea.vmem %s6, %s368
        $region48: #{tpu_custom_call.1} parent=35 // pred_fallthru
          _
      $region36: #{tpu_custom_call.1} parent=5 // pred_fallthru
        _
      %p370 = scmp.le.s32.totalorder 1, %s29
      %p371 = scmp.lt.s32.totalorder %s29, 3
      %p372 = pnand %p370, %p371
      %p373 = pneg %p372
      // Predicated region
      $region49: #{tpu_custom_call.1} parent=5 // pred_check
        _
      $region50: #{tpu_custom_call.1} parent=5 // pred_check_branch
        %375 = sbr.rel (%p372) target = $region52
      $region51: #{tpu_custom_call.1} parent=5 // pred_region
        %s376 = ssub.s32 %s29, 1
        %s377 = sld [smem:[#allocation4 + %s38]]
        %s378 = sld [smem:[#allocation5 + %s38]]
        %s379 = ssub.s32 %s378, 1
        %p380 = scmp.gt.s32.totalorder %s379, 0
        %s381 = scalar_select %p380, %s379, 0
        %p382 = scmp.lt.s32.totalorder %s39, %s381
        %s383 = scalar_select %p382, %s39, %s381
        %s384 = sadd.s32 %s377, %s383
        %p385 = scmp.lt.s32.totalorder %s384, 0
        %s386 = scalar_select %p385, %s384, 0
        %s387 = scalar_lea.vmem %s2, %s386
        %p388 = pneg %p83
        %p389 = pneg %p80
        %s390 = sld [smem:[#allocation4 + %s38]]
        %s391 = sld [smem:[#allocation5 + %s38]]
        %s392 = ssub.s32 %s391, 1
        %p393 = scmp.gt.s32.totalorder %s392, 0
        %s394 = scalar_select %p393, %s392, 0
        %p395 = scmp.lt.s32.totalorder %s39, %s394
        %s396 = scalar_select %p395, %s39, %s394
        %s397 = sadd.s32 %s390, %s396
        %s398 = smul.u32 16, %s397
        %p399 = scmp.lt.s32.totalorder %s398, 15
        %s400 = scalar_select %p399, %s398, 15
        %s401 = smul.addr %s400, 8
        %s402 = scalar_lea.vmem %s3, %s401
        %p403 = pneg %p125
        %p404 = pneg %p122
        %p405 = pneg %p146
        %p406 = pneg %p143
        %p407 = pneg %p167
        %p408 = pneg %p164
        %p409 = scmp.lt.s32.totalorder %s38, 1
        %s410 = scalar_select %p409, %s38, 1
        %s411 = smul.addr %s410, 8
        %s412 = scalar_lea.vmem %s6, %s411
        %p413 = pneg %p193
        %p414 = pneg %p190
        %p415 = pneg %p214
        %p416 = pneg %p211
        %p417 = pneg %p235
        %p418 = pneg %p232
        %p419 = pneg %p256
        %p420 = pneg %p253
        %p421 = pneg %p282
        %p422 = pneg %p279
        %s423 = sand.u32 %s269, 1
        %s424 = scalar_lea.sflag [#allocation7], %s423
        %s425 = sand.u32 %s269, 1
        %s426 = smul.addr %s425, 8
        %s427 = scalar_lea.vmem [#allocation6], %s426
        %s428 = sld [smem:[#allocation4 + %s38]]
        %s429 = sld [smem:[#allocation5 + %s38]]
        %s430 = ssub.s32 %s429, 1
        %p431 = scmp.gt.s32.totalorder %s430, 0
        %s432 = scalar_select %p431, %s430, 0
        %p433 = scmp.lt.s32.totalorder %s39, %s432
        %s434 = scalar_select %p433, %s39, %s432
        %s435 = sadd.s32 %s428, %s434
        %p436 = scmp.lt.s32.totalorder %s435, 0
        %s437 = scalar_select %p436, %s435, 0
        %s438 = scalar_lea.vmem %s2, %s437
        %s439 = sld [smem:[#allocation4 + %s38]]
        %s440 = sld [smem:[#allocation5 + %s38]]
        %s441 = ssub.s32 %s440, 1
        %p442 = scmp.gt.s32.totalorder %s441, 0
        %s443 = scalar_select %p442, %s441, 0
        %p444 = scmp.lt.s32.totalorder %s39, %s443
        %s445 = scalar_select %p444, %s39, %s443
        %s446 = sadd.s32 %s439, %s445
        %s447 = sld [smem:[#allocation4 + %s38]]
        %s448 = sld [smem:[#allocation5 + %s38]]
        %s449 = ssub.s32 %s448, 1
        %p450 = scmp.gt.s32.totalorder %s449, 0
        %s451 = scalar_select %p450, %s449, 0
        %p452 = scmp.lt.s32.totalorder %s39, %s451
        %s453 = scalar_select %p452, %s39, %s451
        %s454 = sadd.s32 %s447, %s453
        %s455 = smul.u32 16, %s454
        %p456 = scmp.lt.s32.totalorder %s455, 15
        %s457 = scalar_select %p456, %s455, 15
        %s458 = smul.addr %s457, 8
        %s459 = scalar_lea.vmem %s3, %s458
        %s460 = sld [smem:[#allocation4 + %s38]]
        %s461 = sld [smem:[#allocation5 + %s38]]
        %s462 = ssub.s32 %s461, 1
        %p463 = scmp.gt.s32.totalorder %s462, 0
        %s464 = scalar_select %p463, %s462, 0
        %p465 = scmp.lt.s32.totalorder %s39, %s464
        %s466 = scalar_select %p465, %s39, %s464
        %s467 = sadd.s32 %s460, %s466
        %s468 = smul.u32 16, %s467
        %p469 = scmp.lt.s32.totalorder %s38, 1
        %s470 = scalar_select %p469, %s38, 1
        %s471 = smul.addr %s470, 8
        %s472 = scalar_lea.vmem %s6, %s471
        %p473 = scmp.eq.s32.totalorder %s39, 0
        // Predicated region
        $region53: #{tpu_custom_call.1} parent=51 // pred_check
          %p474 = pneg %p473
        $region54: #{tpu_custom_call.1} parent=51 // pred_check_branch
          %476 = sbr.rel (%p474) target = $region56
        $region55: #{tpu_custom_call.1} parent=51 // pred_region
          %477 = vst [vmem:[#allocation2] sm:$0xff] 0.0
        $region56: #{tpu_custom_call.1} parent=51 // pred_fallthru
          _
        %s478 = sld [smem:[#allocation5 + %s38]]
        %p479 = scmp.lt.s32.totalorder %s39, %s478
        // Predicated region
        $region57: #{tpu_custom_call.1} parent=51 // pred_check
          %p480 = pneg %p479
        $region58: #{tpu_custom_call.1} parent=51 // pred_check_branch
          %482 = sbr.rel (%p480) target = $region60
        $region59: #{tpu_custom_call.1} parent=51 // pred_region
          %v483 = vld [vmem:[%s438] sm:$0x1]
          %s484 = smul.u32 %s38, 8
          %v485 = vstv %s484
          %v486 = vsub.s32 %v483, %v485
          %v487 = vlaneseq
          %v488 = vshrl.u32 %v487, 7
          %v489 = vlaneseq
          %v490 = vshrl.u32 %v489, 7
          %v491 = vsub.s32 0, %v490
          %v492 = vrot.slane %v486, %v491
          %vm493 = vcmp.eq.s32.totalorder %v488, %v492
          %v494 = vsel %vm493, 1, 0
          %v495 = vcvt.s32.f32 %v494
          %v496 = vld [vmem:[%s459] sm:$0xff]
          %v497 = vld [vmem:[%s459 + $0x8] sm:$0xff]
          %v498 = vld [vmem:[%s459 + $0x10] sm:$0xff]
          %v499 = vld [vmem:[%s459 + $0x18] sm:$0xff]
          %v500 = vld [vmem:[%s459 + $0x20] sm:$0xff]
          %v501 = vld [vmem:[%s459 + $0x28] sm:$0xff]
          %v502 = vld [vmem:[%s459 + $0x30] sm:$0xff]
          %v503 = vld [vmem:[%s459 + $0x38] sm:$0xff]
          %v504 = vld [vmem:[%s459 + $0x40] sm:$0xff]
          %v505 = vld [vmem:[%s459 + $0x48] sm:$0xff]
          %v506 = vld [vmem:[%s459 + $0x50] sm:$0xff]
          %v507 = vld [vmem:[%s459 + $0x58] sm:$0xff]
          %v508 = vld [vmem:[%s459 + $0x60] sm:$0xff]
          %v509 = vld [vmem:[%s459 + $0x68] sm:$0xff]
          %v510 = vld [vmem:[%s459 + $0x70] sm:$0xff]
          %v511 = vld [vmem:[%s459 + $0x78] sm:$0xff]
          %v512 = vld [vmem:[%s4] sm:$0xff]
          %v513 = vld [vmem:[%s4 + $0x8] sm:$0xff]
          %v514 = vld [vmem:[%s4 + $0x10] sm:$0x1]
          %vm515 = vcmask 138240
          %v517 = vsel %vm515, %v496, 0
          %v520 = vsel %vm515, %v497, 0
          %v523 = vsel %vm515, %v498, 0
          %v526 = vsel %vm515, %v499, 0
          %v529 = vsel %vm515, %v500, 0
          %v532 = vsel %vm515, %v501, 0
          %v535 = vsel %vm515, %v502, 0
          %v538 = vsel %vm515, %v503, 0
          %v541 = vsel %vm515, %v504, 0
          %v544 = vsel %vm515, %v505, 0
          %v547 = vsel %vm515, %v506, 0
          %v550 = vsel %vm515, %v507, 0
          %v553 = vsel %vm515, %v508, 0
          %v556 = vsel %vm515, %v509, 0
          %v559 = vsel %vm515, %v510, 0
          %v562 = vsel %vm515, %v511, 0
          %vm564 = vcmask 1040384
          %v566 = vsel %vm564, %v514, 0
          %568 = vmatprep.subr.mxu0 0.0
          %569 = vmatpush1.msra.mxu0 0.0
          %570 = vmatprep.subr.mxu0 0.0
          %571 = vmatpush1.msra.mxu0 0.0
          %572 = vmatprep.subr.mxu0 0.0
          %573 = vmatpush1.msra.mxu0 0.0
          %574 = vmatprep.subr.mxu0 0.0
          %575 = vmatpush1.msra.mxu0 0.0
          %576 = vmatprep.subr.mxu0 0.0
          %577 = vmatpush1.msra.mxu0 0.0
          %578 = vmatprep.subr.mxu0 0.0
          %579 = vmatpush1.msra.mxu0 0.0
          %580 = vmatprep.subr.mxu0 0.0
          %581 = vmatpush1.msra.mxu0 0.0
          %582 = vmatprep.subr.mxu0 0.0
          %583 = vmatpush1.msra.mxu0 0.0
          %584 = vmatprep.subr.mxu0 0.0
          %585 = vmatpush1.msra.mxu0 0.0
          %586 = vmatprep.subr.mxu0 0.0
          %587 = vmatpush1.msra.mxu0 0.0
          %588 = vmatprep.subr.mxu0 0.0
          %589 = vmatpush1.msra.mxu0 0.0
          %590 = vmatprep.subr.mxu0 0.0
          %591 = vmatpush1.msra.mxu0 0.0
          %592 = vmatprep.subr.mxu0 0.0
          %593 = vmatpush1.msra.mxu0 0.0
          %594 = vmatprep.subr.mxu0 0.0
          %595 = vmatpush1.msra.mxu0 %v566
          %596 = vmatprep.subr.mxu0 0.0
          %597 = vmatpush1.msra.mxu0 %v513
          %598 = vmatprep.subr.mxu0 0.0
          %599 = vmatpush1.msra.mxu0 %v512
          %600 = vmatprep.subr.mxu0 0.0
          %601 = vmatpush2.msra.mxu0 0.0
          %602 = vmatprep.subr.mxu0 0.0
          %603 = vmatpush2.msra.mxu0 0.0
          %604 = vmatprep.subr.mxu0 0.0
          %605 = vmatpush2.msra.mxu0 0.0
          %606 = vmatprep.subr.mxu0 0.0
          %607 = vmatpush2.msra.mxu0 0.0
          %608 = vmatprep.subr.mxu0 0.0
          %609 = vmatpush2.msra.mxu0 0.0
          %610 = vmatprep.subr.mxu0 0.0
          %611 = vmatpush2.msra.mxu0 0.0
          %612 = vmatprep.subr.mxu0 0.0
          %613 = vmatpush2.msra.mxu0 0.0
          %614 = vmatprep.subr.mxu0 0.0
          %615 = vmatpush2.msra.mxu0 0.0
          %616 = vmatprep.subr.mxu0 0.0
          %617 = vmatpush2.msra.mxu0 0.0
          %618 = vmatprep.subr.mxu0 0.0
          %619 = vmatpush2.msra.mxu0 0.0
          %620 = vmatprep.subr.mxu0 0.0
          %621 = vmatpush2.msra.mxu0 0.0
          %622 = vmatprep.subr.mxu0 0.0
          %623 = vmatpush2.msra.mxu0 0.0
          %624 = vmatprep.subr.mxu0 0.0
          %625 = vmatpush2.msra.mxu0 0.0
          %626 = vmatprep.subr.mxu0 0.0
          %627 = vmatpush2.msra.mxu0 0.0
          %628 = vmatprep.subr.mxu0 0.0
          %629 = vmatpush2.msra.mxu0 0.0
          %630 = vmatprep.subr.mxu0 0.0
          %631 = vmatpush2.msra.mxu0 0.0
          %632 = vmatprep.mubr.f32.mxu0 0.0
          %633 = vmatmul.mubr.f32.gmra.mxu0 %v517
          %v634 = vpop.f32.mrf.mxu0
          %v635 = vadd.f32 0.0, %v634
          %v636 = vpop.f32.mrf.mxu0
          %637 = vmatprep.mubr.f32.mxu0 0.0
          %638 = vmatmul.mubr.f32.gmra.mxu0 %v520
          %v639 = vpop.f32.mrf.mxu0
          %v640 = vadd.f32 0.0, %v639
          %v641 = vpop.f32.mrf.mxu0
          %642 = vmatprep.mubr.f32.mxu0 0.0
          %643 = vmatmul.mubr.f32.gmra.mxu0 %v523
          %v644 = vpop.f32.mrf.mxu0
          %v645 = vadd.f32 0.0, %v644
          %v646 = vpop.f32.mrf.mxu0
          %647 = vmatprep.mubr.f32.mxu0 0.0
          %648 = vmatmul.mubr.f32.gmra.mxu0 %v526
          %v649 = vpop.f32.mrf.mxu0
          %v650 = vadd.f32 0.0, %v649
          %v651 = vpop.f32.mrf.mxu0
          %652 = vmatprep.mubr.f32.mxu0 0.0
          %653 = vmatmul.mubr.f32.gmra.mxu0 %v529
          %v654 = vpop.f32.mrf.mxu0
          %v655 = vadd.f32 0.0, %v654
          %v656 = vpop.f32.mrf.mxu0
          %657 = vmatprep.mubr.f32.mxu0 0.0
          %658 = vmatmul.mubr.f32.gmra.mxu0 %v532
          %v659 = vpop.f32.mrf.mxu0
          %v660 = vadd.f32 0.0, %v659
          %v661 = vpop.f32.mrf.mxu0
          %662 = vmatprep.mubr.f32.mxu0 0.0
          %663 = vmatmul.mubr.f32.gmra.mxu0 %v535
          %v664 = vpop.f32.mrf.mxu0
          %v665 = vadd.f32 0.0, %v664
          %v666 = vpop.f32.mrf.mxu0
          %667 = vmatprep.mubr.f32.mxu0 0.0
          %668 = vmatmul.mubr.f32.gmra.mxu0 %v538
          %v669 = vpop.f32.mrf.mxu0
          %v670 = vadd.f32 0.0, %v669
          %v671 = vpop.f32.mrf.mxu0
          %672 = vmatprep.mubr.f32.mxu0 0.0
          %673 = vmatmul.mubr.f32.gmra.mxu0 %v541
          %v674 = vpop.f32.mrf.mxu0
          %v675 = vadd.f32 0.0, %v674
          %v676 = vpop.f32.mrf.mxu0
          %677 = vmatprep.mubr.f32.mxu0 0.0
          %678 = vmatmul.mubr.f32.gmra.mxu0 %v544
          %v679 = vpop.f32.mrf.mxu0
          %v680 = vadd.f32 0.0, %v679
          %v681 = vpop.f32.mrf.mxu0
          %682 = vmatprep.mubr.f32.mxu0 0.0
          %683 = vmatmul.mubr.f32.gmra.mxu0 %v547
          %v684 = vpop.f32.mrf.mxu0
          %v685 = vadd.f32 0.0, %v684
          %v686 = vpop.f32.mrf.mxu0
          %687 = vmatprep.mubr.f32.mxu0 0.0
          %688 = vmatmul.mubr.f32.gmra.mxu0 %v550
          %v689 = vpop.f32.mrf.mxu0
          %v690 = vadd.f32 0.0, %v689
          %v691 = vpop.f32.mrf.mxu0
          %692 = vmatprep.mubr.f32.mxu0 0.0
          %693 = vmatmul.mubr.f32.gmra.mxu0 %v553
          %v694 = vpop.f32.mrf.mxu0
          %v695 = vadd.f32 0.0, %v694
          %v696 = vpop.f32.mrf.mxu0
          %697 = vmatprep.mubr.f32.mxu0 0.0
          %698 = vmatmul.mubr.f32.gmra.mxu0 %v556
          %v699 = vpop.f32.mrf.mxu0
          %v700 = vadd.f32 0.0, %v699
          %v701 = vpop.f32.mrf.mxu0
          %702 = vmatprep.mubr.f32.mxu0 0.0
          %703 = vmatmul.mubr.f32.gmra.mxu0 %v559
          %v704 = vpop.f32.mrf.mxu0
          %v705 = vadd.f32 0.0, %v704
          %v706 = vpop.f32.mrf.mxu0
          %707 = vmatprep.mubr.f32.mxu0 0.0
          %708 = vmatmul.mubr.f32.gmra.mxu0 %v562
          %v709 = vpop.f32.mrf.mxu0
          %v710 = vadd.f32 0.0, %v709
          %v711 = vpop.f32.mrf.mxu0
          %712 = vdwg.mxu0
          %v713 = vld [vmem:[#allocation2] sm:$0xff]
          %714 = vmatprep.subr.mxu0 0.0
          %715 = vmatpush1.msra.mxu0 %v710
          %716 = vmatprep.subr.mxu0 0.0
          %717 = vmatpush1.msra.mxu0 %v705
          %718 = vmatprep.subr.mxu0 0.0
          %719 = vmatpush1.msra.mxu0 %v700
          %720 = vmatprep.subr.mxu0 0.0
          %721 = vmatpush1.msra.mxu0 %v695
          %722 = vmatprep.subr.mxu0 0.0
          %723 = vmatpush1.msra.mxu0 %v690
          %724 = vmatprep.subr.mxu0 0.0
          %725 = vmatpush1.msra.mxu0 %v685
          %726 = vmatprep.subr.mxu0 0.0
          %727 = vmatpush1.msra.mxu0 %v680
          %728 = vmatprep.subr.mxu0 0.0
          %729 = vmatpush1.msra.mxu0 %v675
          %730 = vmatprep.subr.mxu0 0.0
          %731 = vmatpush1.msra.mxu0 %v670
          %732 = vmatprep.subr.mxu0 0.0
          %733 = vmatpush1.msra.mxu0 %v665
          %734 = vmatprep.subr.mxu0 0.0
          %735 = vmatpush1.msra.mxu0 %v660
          %736 = vmatprep.subr.mxu0 0.0
          %737 = vmatpush1.msra.mxu0 %v655
          %738 = vmatprep.subr.mxu0 0.0
          %739 = vmatpush1.msra.mxu0 %v650
          %740 = vmatprep.subr.mxu0 0.0
          %741 = vmatpush1.msra.mxu0 %v645
          %742 = vmatprep.subr.mxu0 0.0
          %743 = vmatpush1.msra.mxu0 %v640
          %744 = vmatprep.subr.mxu0 0.0
          %745 = vmatpush1.msra.mxu0 %v635
          %746 = vmatprep.subr.mxu0 0.0
          %747 = vmatpush2.msra.mxu0 0.0
          %748 = vmatprep.subr.mxu0 0.0
          %749 = vmatpush2.msra.mxu0 0.0
          %750 = vmatprep.subr.mxu0 0.0
          %751 = vmatpush2.msra.mxu0 0.0
          %752 = vmatprep.subr.mxu0 0.0
          %753 = vmatpush2.msra.mxu0 0.0
          %754 = vmatprep.subr.mxu0 0.0
          %755 = vmatpush2.msra.mxu0 0.0
          %756 = vmatprep.subr.mxu0 0.0
          %757 = vmatpush2.msra.mxu0 0.0
          %758 = vmatprep.subr.mxu0 0.0
          %759 = vmatpush2.msra.mxu0 0.0
          %760 = vmatprep.subr.mxu0 0.0
          %761 = vmatpush2.msra.mxu0 0.0
          %762 = vmatprep.subr.mxu0 0.0
          %763 = vmatpush2.msra.mxu0 0.0
          %764 = vmatprep.subr.mxu0 0.0
          %765 = vmatpush2.msra.mxu0 0.0
          %766 = vmatprep.subr.mxu0 0.0
          %767 = vmatpush2.msra.mxu0 0.0
          %768 = vmatprep.subr.mxu0 0.0
          %769 = vmatpush2.msra.mxu0 0.0
          %770 = vmatprep.subr.mxu0 0.0
          %771 = vmatpush2.msra.mxu0 0.0
          %772 = vmatprep.subr.mxu0 0.0
          %773 = vmatpush2.msra.mxu0 0.0
          %774 = vmatprep.subr.mxu0 0.0
          %775 = vmatpush2.msra.mxu0 0.0
          %776 = vmatprep.subr.mxu0 0.0
          %777 = vmatpush2.msra.mxu0 0.0
          %778 = vmatprep.mubr.f32.mxu0 0.0
          %779 = vmatmul.mubr.f32.gmra.mxu0 %v495
          %v780 = vpop.f32.mrf.mxu0
          %v781 = vadd.f32 0.0, %v780
          %v782 = vpop.f32.mrf.mxu0
          %783 = vdwg.mxu0
          %v784 = vadd.f32 %v713, %v781
          %785 = vst [vmem:[#allocation2] sm:$0xff] %v784
        $region60: #{tpu_custom_call.1} parent=51 // pred_fallthru
          _
        // Predicated region
        $region61: #{tpu_custom_call.1} parent=51 // pred_check
          %p786 = pneg %p473
        $region62: #{tpu_custom_call.1} parent=51 // pred_check_branch
          %788 = sbr.rel (%p786) target = $region64
        $region63: #{tpu_custom_call.1} parent=51 // pred_region
          %v789 = vld [vmem:[#allocation2] sm:$0xff]
          %vm790 = vcmp.gt.f32.partialorder %v789, 0.0
          %v791 = vsel %vm790, 1, 0
          %v792 = vcvt.s32.f32 %v791
          %v793 = vmax.f32 %v789, 1.0
          %v794 = vrcp.pop %v793
          %v795 = vmul.f32 %v794, %v792
          %797 = vset.pattern.permute.xlu0 16
          %798 = vperm.xlu0 %797, %v795
          %v799 = vpop.permute.xlu0 %798
          %v801 = vmul.f32 %v789, %v799
          %v802 = vld [vmem:[%s5] sm:$0x1]
          %v804 = vlaneseq
          %v805 = vshrl.u32 %v804, 7
          %v806 = vsub.s32 0, %v805
          %v807 = vrot.slane %v802, %v806
          %810 = vset.pattern.permute.xlu0 16
          %811 = vperm.xlu0 %810, %v792
          %v812 = vpop.permute.xlu0 %811
          %v814 = vmul.f32 %v807, %v812
          %v815 = vadd.f32 %v801, %v814
          %v816 = vld [vmem:[%s472] sm:$0xff]
          %v817 = vld [vmem:[%s7] sm:$0xff]
          %v818 = vld [vmem:[%s8] sm:$0xff]
          %v819 = vld [vmem:[%s8 + $0x8] sm:$0xff]
          %v820 = vld [vmem:[%s8 + $0x10] sm:$0xff]
          %v821 = vld [vmem:[%s8 + $0x18] sm:$0xff]
          %v822 = vld [vmem:[%s8 + $0x20] sm:$0xff]
          %v823 = vld [vmem:[%s8 + $0x28] sm:$0xff]
          %v824 = vld [vmem:[%s8 + $0x30] sm:$0xff]
          %v825 = vld [vmem:[%s8 + $0x38] sm:$0xff]
          %v826 = vld [vmem:[%s8 + $0x40] sm:$0xff]
          %v827 = vld [vmem:[%s8 + $0x48] sm:$0xff]
          %v828 = vld [vmem:[%s8 + $0x50] sm:$0xff]
          %v829 = vld [vmem:[%s8 + $0x58] sm:$0xff]
          %v830 = vld [vmem:[%s8 + $0x60] sm:$0xff]
          %v831 = vld [vmem:[%s8 + $0x68] sm:$0xff]
          %v832 = vld [vmem:[%s8 + $0x70] sm:$0xff]
          %v833 = vld [vmem:[%s8 + $0x78] sm:$0xff]
          %834 = vmatprep.subr.mxu0 0.0
          %835 = vmatpush1.msra.mxu0 %v833
          %836 = vmatprep.subr.mxu0 0.0
          %837 = vmatpush1.msra.mxu0 %v832
          %838 = vmatprep.subr.mxu0 0.0
          %839 = vmatpush1.msra.mxu0 %v831
          %840 = vmatprep.subr.mxu0 0.0
          %841 = vmatpush1.msra.mxu0 %v830
          %842 = vmatprep.subr.mxu0 0.0
          %843 = vmatpush1.msra.mxu0 %v829
          %844 = vmatprep.subr.mxu0 0.0
          %845 = vmatpush1.msra.mxu0 %v828
          %846 = vmatprep.subr.mxu0 0.0
          %847 = vmatpush1.msra.mxu0 %v827
          %848 = vmatprep.subr.mxu0 0.0
          %849 = vmatpush1.msra.mxu0 %v826
          %850 = vmatprep.subr.mxu0 0.0
          %851 = vmatpush1.msra.mxu0 %v825
          %852 = vmatprep.subr.mxu0 0.0
          %853 = vmatpush1.msra.mxu0 %v824
          %854 = vmatprep.subr.mxu0 0.0
          %855 = vmatpush1.msra.mxu0 %v823
          %856 = vmatprep.subr.mxu0 0.0
          %857 = vmatpush1.msra.mxu0 %v822
          %858 = vmatprep.subr.mxu0 0.0
          %859 = vmatpush1.msra.mxu0 %v821
          %860 = vmatprep.subr.mxu0 0.0
          %861 = vmatpush1.msra.mxu0 %v820
          %862 = vmatprep.subr.mxu0 0.0
          %863 = vmatpush1.msra.mxu0 %v819
          %864 = vmatprep.subr.mxu0 0.0
          %865 = vmatpush1.msra.mxu0 %v818
          %866 = vmatprep.subr.mxu0 0.0
          %867 = vmatpush2.msra.mxu0 0.0
          %868 = vmatprep.subr.mxu0 0.0
          %869 = vmatpush2.msra.mxu0 0.0
          %870 = vmatprep.subr.mxu0 0.0
          %871 = vmatpush2.msra.mxu0 0.0
          %872 = vmatprep.subr.mxu0 0.0
          %873 = vmatpush2.msra.mxu0 0.0
          %874 = vmatprep.subr.mxu0 0.0
          %875 = vmatpush2.msra.mxu0 0.0
          %876 = vmatprep.subr.mxu0 0.0
          %877 = vmatpush2.msra.mxu0 0.0
          %878 = vmatprep.subr.mxu0 0.0
          %879 = vmatpush2.msra.mxu0 0.0
          %880 = vmatprep.subr.mxu0 0.0
          %881 = vmatpush2.msra.mxu0 0.0
          %882 = vmatprep.subr.mxu0 0.0
          %883 = vmatpush2.msra.mxu0 0.0
          %884 = vmatprep.subr.mxu0 0.0
          %885 = vmatpush2.msra.mxu0 0.0
          %886 = vmatprep.subr.mxu0 0.0
          %887 = vmatpush2.msra.mxu0 0.0
          %888 = vmatprep.subr.mxu0 0.0
          %889 = vmatpush2.msra.mxu0 0.0
          %890 = vmatprep.subr.mxu0 0.0
          %891 = vmatpush2.msra.mxu0 0.0
          %892 = vmatprep.subr.mxu0 0.0
          %893 = vmatpush2.msra.mxu0 0.0
          %894 = vmatprep.subr.mxu0 0.0
          %895 = vmatpush2.msra.mxu0 0.0
          %896 = vmatprep.subr.mxu0 0.0
          %897 = vmatpush2.msra.mxu0 0.0
          %898 = vmatprep.mubr.f32.mxu0 0.0
          %899 = vmatmul.mubr.f32.gmra.mxu0 %v815
          %v900 = vpop.f32.mrf.mxu0
          %v901 = vadd.f32 0.0, %v900
          %v902 = vpop.f32.mrf.mxu0
          %903 = vdwg.mxu0
          %vm904 = vcmask 64512
          %v906 = vsel %vm904, %v816, 0
          %908 = vmatprep.subr.mxu0 0.0
          %909 = vmatpush1.msra.mxu0 0.0
          %910 = vmatprep.subr.mxu0 0.0
          %911 = vmatpush1.msra.mxu0 0.0
          %912 = vmatprep.subr.mxu0 0.0
          %913 = vmatpush1.msra.mxu0 0.0
          %914 = vmatprep.subr.mxu0 0.0
          %915 = vmatpush1.msra.mxu0 0.0
          %916 = vmatprep.subr.mxu0 0.0
          %917 = vmatpush1.msra.mxu0 0.0
          %918 = vmatprep.subr.mxu0 0.0
          %919 = vmatpush1.msra.mxu0 0.0
          %920 = vmatprep.subr.mxu0 0.0
          %921 = vmatpush1.msra.mxu0 0.0
          %922 = vmatprep.subr.mxu0 0.0
          %923 = vmatpush1.msra.mxu0 0.0
          %924 = vmatprep.subr.mxu0 0.0
          %925 = vmatpush1.msra.mxu0 0.0
          %926 = vmatprep.subr.mxu0 0.0
          %927 = vmatpush1.msra.mxu0 0.0
          %928 = vmatprep.subr.mxu0 0.0
          %929 = vmatpush1.msra.mxu0 0.0
          %930 = vmatprep.subr.mxu0 0.0
          %931 = vmatpush1.msra.mxu0 0.0
          %932 = vmatprep.subr.mxu0 0.0
          %933 = vmatpush1.msra.mxu0 0.0
          %934 = vmatprep.subr.mxu0 0.0
          %935 = vmatpush1.msra.mxu0 0.0
          %936 = vmatprep.subr.mxu0 0.0
          %937 = vmatpush1.msra.mxu0 0.0
          %938 = vmatprep.subr.mxu0 0.0
          %939 = vmatpush1.msra.mxu0 %v817
          %940 = vmatprep.subr.mxu0 0.0
          %941 = vmatpush2.msra.mxu0 0.0
          %942 = vmatprep.subr.mxu0 0.0
          %943 = vmatpush2.msra.mxu0 0.0
          %944 = vmatprep.subr.mxu0 0.0
          %945 = vmatpush2.msra.mxu0 0.0
          %946 = vmatprep.subr.mxu0 0.0
          %947 = vmatpush2.msra.mxu0 0.0
          %948 = vmatprep.subr.mxu0 0.0
          %949 = vmatpush2.msra.mxu0 0.0
          %950 = vmatprep.subr.mxu0 0.0
          %951 = vmatpush2.msra.mxu0 0.0
          %952 = vmatprep.subr.mxu0 0.0
          %953 = vmatpush2.msra.mxu0 0.0
          %954 = vmatprep.subr.mxu0 0.0
          %955 = vmatpush2.msra.mxu0 0.0
          %956 = vmatprep.subr.mxu0 0.0
          %957 = vmatpush2.msra.mxu0 0.0
          %958 = vmatprep.subr.mxu0 0.0
          %959 = vmatpush2.msra.mxu0 0.0
          %960 = vmatprep.subr.mxu0 0.0
          %961 = vmatpush2.msra.mxu0 0.0
          %962 = vmatprep.subr.mxu0 0.0
          %963 = vmatpush2.msra.mxu0 0.0
          %964 = vmatprep.subr.mxu0 0.0
          %965 = vmatpush2.msra.mxu0 0.0
          %966 = vmatprep.subr.mxu0 0.0
          %967 = vmatpush2.msra.mxu0 0.0
          %968 = vmatprep.subr.mxu0 0.0
          %969 = vmatpush2.msra.mxu0 0.0
          %970 = vmatprep.subr.mxu0 0.0
          %971 = vmatpush2.msra.mxu0 0.0
          %972 = vmatprep.mubr.f32.mxu0 0.0
          %973 = vmatmul.mubr.f32.gmra.mxu0 %v906
          %v974 = vpop.f32.mrf.mxu0
          %v975 = vadd.f32 %v901, %v974
          %v976 = vpop.f32.mrf.mxu0
          %977 = vdwg.mxu0
          %v978 = vld [vmem:[%s9] sm:$0x1]
          %v980 = vlaneseq
          %v981 = vshrl.u32 %v980, 7
          %v982 = vsub.s32 0, %v981
          %v983 = vrot.slane %v978, %v982
          %v985 = vadd.f32 %v975, %v983
          %v986 = vmax.f32 %v985, 0.0
          %987 = vst [vmem:[%s427] sm:$0xff] %v986
        $region64: #{tpu_custom_call.1} parent=51 // pred_fallthru
          _
        %s988 = sand.u32 %s269, 1
        %s989 = scalar_lea.sflag [#allocation7], %s988
        %s990 = sand.u32 %s269, 1
        %s991 = smul.addr %s990, 8
        %s992 = scalar_lea.vmem [#allocation6], %s991
        // Predicated region
        $region65: #{tpu_custom_call.1} parent=51 // pred_check
          %p993 = pneg %p279
        $region66: #{tpu_custom_call.1} parent=51 // pred_check_branch
          %995 = sbr.rel (%p993) target = $region68
        $region67: #{tpu_custom_call.1} parent=51 // pred_region
          %s997 = ssub.s32 128, 128
          %998 = vsyncadd %s989, %s997
          %s999 = smul.addr %s38, 128
          %s1000 = scalar_lea.hbm %s10, %s999
          %s1002 = sshll.u32 %s992, 4
          %s1003 = int_to_ptr.vmem [resolvable:$true] %s1002
          %1005 = dma.vmem_to_hbm [thread:$0]  %s1003, 128, %s1000, %s989
        $region68: #{tpu_custom_call.1} parent=51 // pred_fallthru
          _
      $region52: #{tpu_custom_call.1} parent=5 // pred_fallthru
        _
      %p1006 = scmp.le.s32.totalorder 2, %s29
      // Predicated region
      $region69: #{tpu_custom_call.1} parent=5 // pred_check
        %p1007 = pneg %p1006
      $region70: #{tpu_custom_call.1} parent=5 // pred_check_branch
        %1009 = sbr.rel (%p1007) target = $region72
      $region71: #{tpu_custom_call.1} parent=5 // pred_region
        %s1010 = ssub.s32 %s29, 2
        // Predicated region
        $region73: #{tpu_custom_call.1} parent=71 // pred_check
          %p1011 = pneg %p285
        $region74: #{tpu_custom_call.1} parent=71 // pred_check_branch
          %1013 = sbr.rel (%p1011) target = $region76
        $region75: #{tpu_custom_call.1} parent=71 // pred_region
          %s1014 = sand.u32 %s270, 1
          %s1015 = scalar_lea.sflag [#allocation7], %s1014
          %s1016 = sand.u32 %s270, 1
          %s1017 = smul.addr %s1016, 8
          %s1018 = scalar_lea.vmem [#allocation6], %s1017
          %1019 = dma.done %s1015, 128
        $region76: #{tpu_custom_call.1} parent=71 // pred_fallthru
          _
      $region72: #{tpu_custom_call.1} parent=5 // pred_fallthru
        _
    $region6: #{tpu_custom_call.1} parent=1 // loop_footer
      %s33 = sadd.s32 1, %s29
    $region7: #{tpu_custom_call.1} parent=1 // loop_footer_branch
      %28 = sbr.rel target = $region3
    $region8: #{tpu_custom_call.1} parent=1 // loop_exit
      _
    %1020 = vsyncpa [#allocation7], 1
    %s1021 = scalar_lea.sflag [#allocation7], 1
    %1022 = vsyncpa %s1021, 1

</llo_original>
